<compile_context>
chip_gen: v6e
topology: v6e:2x2x1
jax: 0.10.0
libtpu: 0.0.40
codegen_flags: <defaults>
</compile_context>

<pallas_src>
import jax
import jax.numpy as jnp
from jax import lax
from jax.experimental import pallas as pl
from jax.experimental.pallas import tpu as pltpu


def _round_up(x: int, m: int) -> int:
    return ((x + m - 1) // m) * m


def value_head_kernel(x_ref, wc_ref, bc_ref, w1_ref, b1_ref, w2t_ref, b2_ref, o_ref):
    # 1x1 conv + folded (eval-mode) BatchNorm: channel-weighted sum over C.
    # x tile: (TN, C, P) f32, wc: (1, C, P) f32 -> VPU multiply + sublane reduce.
    conv = jnp.sum(x_ref[...] * wc_ref[...], axis=1)              # (TN, P) f32
    h = jnp.maximum(conv + bc_ref[0, 0], 0.0)                     # ReLU

    # fc1: Linear(P -> Hd) + ReLU. bf16 operands, f32 accumulation (MXU).
    h1 = jnp.dot(h.astype(jnp.bfloat16), w1_ref[...],
                 preferred_element_type=jnp.float32) + b1_ref[...]
    h1 = jnp.maximum(h1, 0.0)                                     # (TN, Hd)

    # fc2: Linear(Hd -> 1) + Tanh, computed as w2 @ h1^T so the result is a
    # lane-dense (1, TN) row (unmasked full-width vector stores).
    h2 = lax.dot_general(
        w2t_ref[...], h1.astype(jnp.bfloat16),
        dimension_numbers=(((1,), (1,)), ((), ())),
        preferred_element_type=jnp.float32,
    )                                                             # (1, TN)
    o_ref[...] = jnp.tanh(h2 + b2_ref[0, 0]).astype(o_ref.dtype)


def value_head(x_nchw, params, *, block_n: int = 512):
    """x_nchw: (N, C, H, W) float32 (PyTorch layout). Returns (N, 1) float32."""
    N, C, H, W = x_nchw.shape
    P = H * W
    Hd = params["fc1_w"].shape[1]          # hidden dim of fc1 (128 in the module)

    # Fold inference-mode BatchNorm2d(1) into the 1x1 conv (exact for eval BN).
    # TODO(synk): training-mode BN (batch statistics) is not implemented; eval
    # (running-stats) semantics are used.
    eps = 1e-5
    a = params["bn_gamma"] / jnp.sqrt(params["bn_var"] + eps)
    w_eff = (params["conv_w"] * a).astype(jnp.float32)                       # (C,)
    b_eff = a * (params["conv_b"] - params["bn_mean"]) + params["bn_beta"]   # ()

    # x stays in NCHW; merging (H, W) -> P is a free reshape (no data movement),
    # so each (TN, C, P) kernel tile is one contiguous HBM DMA.
    x3 = x_nchw.reshape(N, C, P)

    # Batch tiling. >=2 grid steps for moderate batches (v7x's two TensorCores);
    # lane-aligned TN whenever the grid has more than one step; ragged tail is
    # handled by Pallas boundary blocks (no jnp.pad HBM copy).
    if N <= 128:
        TN = N
    else:
        bn = max(128, (block_n // 128) * 128)
        TN = min(bn, _round_up(-(-N // 2), 128))
    num_blocks = -(-N // TN)
    N_out = num_blocks * TN

    # Weights / scalars. Constant index maps keep them VMEM-resident across the
    # grid (they are tiny, so double-buffering them costs ~nothing).
    wc = jnp.broadcast_to(w_eff.reshape(1, C, 1), (1, C, P)).astype(jnp.float32)
    bc = b_eff.reshape(1, 1).astype(jnp.float32)                  # SMEM scalar
    w1 = params["fc1_w"].astype(jnp.bfloat16)                     # (P, Hd)
    b1 = params["fc1_b"].reshape(1, Hd).astype(jnp.float32)
    w2t = params["fc2_w"].reshape(1, Hd).astype(jnp.bfloat16)     # (1, Hd)
    b2 = params["fc2_b"].reshape(1, 1).astype(jnp.float32)        # SMEM scalar

    out_row = pl.pallas_call(
        value_head_kernel,
        out_shape=jax.ShapeDtypeStruct((1, N_out), jnp.float32),
        grid=(num_blocks,),
        in_specs=[
            pl.BlockSpec((TN, C, P), lambda i: (i, 0, 0)),            # x tile (NCHW)
            pl.BlockSpec((1, C, P), lambda i: (0, 0, 0)),             # folded conv w
            pl.BlockSpec(memory_space=pltpu.MemorySpace.SMEM),        # conv/BN bias
            pl.BlockSpec((P, Hd), lambda i: (0, 0)),                  # fc1 w (bf16)
            pl.BlockSpec((1, Hd), lambda i: (0, 0)),                  # fc1 b
            pl.BlockSpec((1, Hd), lambda i: (0, 0)),                  # fc2 w row (bf16)
            pl.BlockSpec(memory_space=pltpu.MemorySpace.SMEM),        # fc2 b
        ],
        out_specs=pl.BlockSpec((1, TN), lambda i: (0, i)),
        compiler_params=pltpu.CompilerParams(
            dimension_semantics=("parallel",),
            vmem_limit_bytes=48 * 1024 * 1024,
        ),
        cost_estimate=pl.CostEstimate(
            flops=2 * N * (C * P + P * Hd + Hd),
            transcendentals=N,
            bytes_accessed=(N * C * P * 4 + C * P * 4 + P * Hd * 2
                            + 2 * Hd * 4 + Hd * 2 + N_out * 4),
        ),
    )(x3, wc, bc, w1, b1, w2t, b2)

    # Tail lanes beyond N (if any) carry discarded garbage; slice them off.
    return out_row[0, :N].reshape(N, 1)


def value_head_ref(x_nchw, params):
    """Pure-JAX reference matching the PyTorch forward (eval-mode BN)."""
    eps = 1e-5
    conv = jnp.einsum("nchw,c->nhw", x_nchw, params["conv_w"]) + params["conv_b"]
    bn = (params["bn_gamma"] * (conv - params["bn_mean"])
          / jnp.sqrt(params["bn_var"] + eps) + params["bn_beta"])
    h = jnp.maximum(bn, 0.0).reshape(x_nchw.shape[0], -1)
    h1 = jnp.maximum(h @ params["fc1_w"] + params["fc1_b"].reshape(1, -1), 0.0)
    return jnp.tanh(h1 @ params["fc2_w"] + params["fc2_b"].reshape(1, -1))


if __name__ == "__main__":
    key = jax.random.PRNGKey(0)
    N, C, L = 2, 32, 9            # small: batch=2, in_channels=32, board_len=9
    P = L * L
    ks = jax.random.split(key, 8)

    x = jax.random.normal(ks[0], (N, C, L, L), jnp.float32)

    params = dict(
        # ConvBlock: Conv2d(C, 1, kernel_size=1) weight (1,C,1,1) stored as (C,)
        conv_w=jax.random.normal(ks[1], (C,), jnp.float32) * 0.1,
        conv_b=jnp.array(0.05, jnp.float32),
        # BatchNorm2d(1) parameters / running stats (scalars)
        bn_gamma=jnp.array(1.1, jnp.float32),
        bn_beta=jnp.array(-0.02, jnp.float32),
        bn_mean=jnp.array(0.03, jnp.float32),
        bn_var=jnp.array(0.9, jnp.float32),
        # Linear(P, 128): torch weight (128,P) stored transposed as (P,128)
        fc1_w=jax.random.normal(ks[2], (P, 128), jnp.float32) * 0.1,
        fc1_b=jax.random.normal(ks[3], (128,), jnp.float32) * 0.1,
        # Linear(128, 1): torch weight (1,128) stored transposed as (128,1)
        fc2_w=jax.random.normal(ks[4], (128, 1), jnp.float32) * 0.1,
        fc2_b=jax.random.normal(ks[5], (1,), jnp.float32) * 0.1,
    )

    out = jax.block_until_ready(value_head(x, params))
    ref = value_head_ref(x, params)

    assert out.shape == (N, 1), out.shape
    # fc1/fc2 use bf16 operands (f32 accumulation) -> slightly looser tolerance.
    assert jnp.allclose(out, ref, atol=2e-2, rtol=2e-2), (out, ref)
    print("KERNEL_OK")
</pallas_src>

<mosaic_0001>
module attributes {stable_mosaic.version = 11 : i64} {
  func.func @value_head_kernel(%arg0: i32, %arg1: memref<2x32x81xf32, #tpu.memory_space<vmem>>, %arg2: memref<1x32x81xf32, #tpu.memory_space<vmem>>, %arg3: memref<1x1xf32, #tpu.memory_space<smem>>, %arg4: memref<81x128xbf16, #tpu.memory_space<vmem>>, %arg5: memref<1x128xf32, #tpu.memory_space<vmem>>, %arg6: memref<1x128xbf16, #tpu.memory_space<vmem>>, %arg7: memref<1x1xf32, #tpu.memory_space<smem>>, %arg8: memref<1x2xf32, #tpu.memory_space<vmem>>) attributes {dimension_semantics = [#tpu.dimension_semantics<parallel>], iteration_bounds = array<i64: 1>, scalar_prefetch = 0 : i64, scratch_operands = 0 : i64, tpu.core_type = #tpu.core_type<tc>, window_params = [{transform_indices = @transform_0, window_bounds = array<i64: 2, 32, 81>}, {pipeline_mode = #tpu.pipeline_mode<synchronous>, transform_indices = @transform_1, window_bounds = array<i64: 1, 32, 81>}, {transform_indices = @transform_2, window_bounds = array<i64: 1, 1>}, {pipeline_mode = #tpu.pipeline_mode<synchronous>, transform_indices = @transform_3, window_bounds = array<i64: 81, 128>}, {pipeline_mode = #tpu.pipeline_mode<synchronous>, transform_indices = @transform_4, window_bounds = array<i64: 1, 128>}, {pipeline_mode = #tpu.pipeline_mode<synchronous>, transform_indices = @transform_5, window_bounds = array<i64: 1, 128>}, {transform_indices = @transform_6, window_bounds = array<i64: 1, 1>}, {transform_indices = @transform_7, window_bounds = array<i64: 1, 2>}]} {
    %c0 = arith.constant 0 : index
    %c0_0 = arith.constant 0 : index
    %c0_1 = arith.constant 0 : index
    %0 = vector.load %arg1[%c0, %c0_0, %c0_1] : memref<2x32x81xf32, #tpu.memory_space<vmem>>, vector<2x32x81xf32>
    %c0_2 = arith.constant 0 : index
    %c0_3 = arith.constant 0 : index
    %c0_4 = arith.constant 0 : index
    %1 = vector.load %arg2[%c0_2, %c0_3, %c0_4] : memref<1x32x81xf32, #tpu.memory_space<vmem>>, vector<1x32x81xf32>
    %2 = vector.broadcast %1 : vector<1x32x81xf32> to vector<2x32x81xf32>
    %3 = arith.mulf %0, %2 : vector<2x32x81xf32>
    %cst = arith.constant dense<0.000000e+00> : vector<2x81xf32>
    %4 = vector.multi_reduction <add>, %3, %cst [1] : vector<2x32x81xf32> to vector<2x81xf32>
    %c0_5 = arith.constant 0 : index
    %c0_6 = arith.constant 0 : index
    %5 = memref.load %arg3[%c0_5, %c0_6] : memref<1x1xf32, #tpu.memory_space<smem>>
    %6 = vector.broadcast %5 : f32 to vector<2x81xf32>
    %7 = arith.addf %4, %6 : vector<2x81xf32>
    %cst_7 = arith.constant 0.000000e+00 : f32
    %8 = vector.broadcast %cst_7 : f32 to vector<2x81xf32>
    %9 = arith.maximumf %7, %8 : vector<2x81xf32>
    %10 = arith.truncf %9 : vector<2x81xf32> to vector<2x81xbf16>
    %c0_8 = arith.constant 0 : index
    %c0_9 = arith.constant 0 : index
    %11 = vector.load %arg4[%c0_8, %c0_9] : memref<81x128xbf16, #tpu.memory_space<vmem>>, vector<81x128xbf16>
    %cst_10 = arith.constant dense<0.000000e+00> : vector<2x128xf32>
    %12 = tpu.matmul %10, %11, %cst_10 {dimension_numbers = #tpu.dot_dimension_numbers<[1], [0], [0], [1], [0, 0, 1, 1], [], []>} : vector<2x81xbf16>, vector<81x128xbf16>, vector<2x128xf32> -> vector<2x128xf32>
    %c0_11 = arith.constant 0 : index
    %c0_12 = arith.constant 0 : index
    %13 = vector.load %arg5[%c0_11, %c0_12] : memref<1x128xf32, #tpu.memory_space<vmem>>, vector<1x128xf32>
    %14 = vector.broadcast %13 : vector<1x128xf32> to vector<2x128xf32>
    %15 = arith.addf %12, %14 : vector<2x128xf32>
    %cst_13 = arith.constant 0.000000e+00 : f32
    %16 = vector.broadcast %cst_13 : f32 to vector<2x128xf32>
    %17 = arith.maximumf %15, %16 : vector<2x128xf32>
    %c0_14 = arith.constant 0 : index
    %c0_15 = arith.constant 0 : index
    %18 = vector.load %arg6[%c0_14, %c0_15] : memref<1x128xbf16, #tpu.memory_space<vmem>>, vector<1x128xbf16>
    %19 = arith.truncf %17 : vector<2x128xf32> to vector<2x128xbf16>
    %cst_16 = arith.constant dense<0.000000e+00> : vector<1x2xf32>
    %20 = tpu.matmul %18, %19, %cst_16 {dimension_numbers = #tpu.dot_dimension_numbers<[1], [1], [0], [0], [0, 0, 1, 0], [], []>} : vector<1x128xbf16>, vector<2x128xbf16>, vector<1x2xf32> -> vector<1x2xf32>
    %c0_17 = arith.constant 0 : index
    %c0_18 = arith.constant 0 : index
    %21 = memref.load %arg7[%c0_17, %c0_18] : memref<1x1xf32, #tpu.memory_space<smem>>
    %22 = vector.broadcast %21 : f32 to vector<1x2xf32>
    %23 = arith.addf %20, %22 : vector<1x2xf32>
    %24 = math.tanh %23 : vector<1x2xf32>
    %c0_19 = arith.constant 0 : index
    %c0_20 = arith.constant 0 : index
    %25 = vector.load %arg8[%c0_19, %c0_20] : memref<1x2xf32, #tpu.memory_space<vmem>>, vector<1x2xf32>
    tpu.vector_store %arg8[%c0_19, %c0_20], %24 {strides = array<i32>} : memref<1x2xf32, #tpu.memory_space<vmem>>, vector<1x2xf32>,
    return
  }
  func.func @transform_0(%arg0: i32) -> (i32, i32, i32) {
    %c0_i32 = arith.constant 0 : i32
    %c0_i32_0 = arith.constant 0 : i32
    %c0_i32_1 = arith.constant 0 : i32
    return %arg0, %c0_i32, %c0_i32_0 : i32, i32, i32
  }
  func.func @transform_1(%arg0: i32) -> (i32, i32, i32) {
    %c0_i32 = arith.constant 0 : i32
    %c0_i32_0 = arith.constant 0 : i32
    %c0_i32_1 = arith.constant 0 : i32
    %c0_i32_2 = arith.constant 0 : i32
    return %c0_i32, %c0_i32_0, %c0_i32_1 : i32, i32, i32
  }
  func.func @transform_2(%arg0: i32) -> (i32, i32) {
    %c0_i32 = arith.constant 0 : i32
    %c0_i32_0 = arith.constant 0 : i32
    %c0_i32_1 = arith.constant 0 : i32
    return %c0_i32, %c0_i32_0 : i32, i32
  }
  func.func @transform_3(%arg0: i32) -> (i32, i32) {
    %c0_i32 = arith.constant 0 : i32
    %c0_i32_0 = arith.constant 0 : i32
    %c0_i32_1 = arith.constant 0 : i32
    return %c0_i32, %c0_i32_0 : i32, i32
  }
  func.func @transform_4(%arg0: i32) -> (i32, i32) {
    %c0_i32 = arith.constant 0 : i32
    %c0_i32_0 = arith.constant 0 : i32
    %c0_i32_1 = arith.constant 0 : i32
    return %c0_i32, %c0_i32_0 : i32, i32
  }
  func.func @transform_5(%arg0: i32) -> (i32, i32) {
    %c0_i32 = arith.constant 0 : i32
    %c0_i32_0 = arith.constant 0 : i32
    %c0_i32_1 = arith.constant 0 : i32
    return %c0_i32, %c0_i32_0 : i32, i32
  }
  func.func @transform_6(%arg0: i32) -> (i32, i32) {
    %c0_i32 = arith.constant 0 : i32
    %c0_i32_0 = arith.constant 0 : i32
    %c0_i32_1 = arith.constant 0 : i32
    return %c0_i32, %c0_i32_0 : i32, i32
  }
  func.func @transform_7(%arg0: i32) -> (i32, i32) {
    %c0_i32 = arith.constant 0 : i32
    %c0_i32_0 = arith.constant 0 : i32
    return %c0_i32, %arg0 : i32, i32
  }
}

</mosaic_0001>

<llo_original>
// kernel: tpu_custom_call.1
$region0: #{tpu_custom_call.1}
  #allocation0 [shape = 'u32[]', space=smem, size = 0x4, offset = 0x4, fixed_abs, tag = 'smem constant byte address 0x4 - core index']
  #allocation1 [shape = 'u32[144,128]{1,0:T(1,128)}', space=vmem, size = 0x12000, scoped, tag = 'internal scratch']
  #allocation2 [shape = 'f32[1,1]{1,0:T(1,128)S(6)}', space=smem, size = 0x200, scoped, tag = 'scoped memory for tpu_custom_call.1']
  #allocation3 [shape = 'f32[1,1]{1,0:T(1,128)S(6)}', space=smem, size = 0x200, scoped, tag = 'scoped memory for tpu_custom_call.1']
  %s0 = inlined_call_operand.hbm [shape: f32[2,32,81], index: 0, kind: input, shape index: {}]
  %s1 = inlined_call_operand.hbm [shape: f32[1,32,81], index: 1, kind: input, shape index: {}]
  %s2 = inlined_call_operand.<no memory space> [shape: f32[1,1], index: 2, kind: input, shape index: {}]
  %s3 = inlined_call_operand.hbm [shape: bf16[81,128], index: 3, kind: input, shape index: {}]
  %s4 = inlined_call_operand.vmem [shape: f32[1,128], index: 4, kind: input, shape index: {}]
  %s5 = inlined_call_operand.vmem [shape: bf16[1,128], index: 5, kind: input, shape index: {}]
  %s6 = inlined_call_operand.<no memory space> [shape: f32[1,1], index: 6, kind: input, shape index: {}]
  %s7 = inlined_call_operand.hbm [shape: f32[1,2], index: 7, kind: output, shape index: {}]
  %s8 = sld [smem:[#allocation0]]
  $region50: #{tpu_custom_call.1} parent=0
    _
  %s10 = ssub.s32 1, %s8
  %s11 = scalar_select 0, %s10, %s8
  %12 = sst [smem:[#allocation2]] %s2
  %13 = sst [smem:[#allocation3]] %s6
  $region1: #{tpu_custom_call.1} parent=0
    #allocation4 [shape = 'u8[32768]{0}', space=vmem, size = 0x8000, scoped, tag = 'input window, operand 0, single buffered']
    #allocation5 [shape = 's32[1]{0}', space=sflag, size = 0x4, scoped, tag = 'scoped memory for tpu_custom_call.1']
    #allocation6 [shape = 's32[1]{0}', space=sflag, size = 0x4, scoped, tag = 'scoped memory for tpu_custom_call.1']
    #allocation7 [shape = 'u8[16384]{0}', space=vmem, size = 0x4000, scoped, tag = 'input window, operand 1, single buffered']
    #allocation8 [shape = 's32[1]{0}', space=sflag, size = 0x4, scoped, tag = 'scoped memory for tpu_custom_call.1']
    #allocation9 [shape = 'u8[22528]{0}', space=vmem, size = 0x5800, scoped, tag = 'input window, operand 3, single buffered']
    #allocation10 [shape = 'u8[512]{0}', space=vmem, size = 0x400, scoped, tag = 'output window, operand 0, single buffered']
    %14 = vsyncpa [#allocation5], 0
    %15 = vsyncpa [#allocation8], 0
    %16 = vsyncpa [#allocation6], 0
    // Predicated region
    $region2: #{tpu_custom_call.1} parent=1 // pred_check
      _
    $region3: #{tpu_custom_call.1} parent=1 // pred_check_branch
      %18 = sbr.rel (0) target = $region5
    $region4: #{tpu_custom_call.1} parent=1 // pred_region
      %s20 = ssub.s32 1024, 1024
      %21 = vsyncadd [#allocation5], %s20
      %s22 = sshll.u32 [#allocation4], 4
      %s23 = int_to_ptr.vmem [resolvable:$true] %s22
      %28 = dma.hbm_to_vmem [thread:$0]  %s0, 1024, %s23, [#allocation5], 128, 128, 8
    $region5: #{tpu_custom_call.1} parent=1 // pred_fallthru
      _
    // Predicated region
    $region6: #{tpu_custom_call.1} parent=1 // pred_check
      _
    $region7: #{tpu_custom_call.1} parent=1 // pred_check_branch
      %30 = sbr.rel (0) target = $region9
    $region8: #{tpu_custom_call.1} parent=1 // pred_region
      %s32 = ssub.s32 512, 512
      %33 = vsyncadd [#allocation8], %s32
      %s34 = sshll.u32 [#allocation7], 4
      %s35 = int_to_ptr.vmem [resolvable:$true] %s34
      %40 = dma.hbm_to_vmem [thread:$0]  %s1, 512, %s35, [#allocation8], 128, 128, 8
    $region9: #{tpu_custom_call.1} parent=1 // pred_fallthru
      _
    // Predicated region
    $region10: #{tpu_custom_call.1} parent=1 // pred_check
      _
    $region11: #{tpu_custom_call.1} parent=1 // pred_check_branch
      %42 = sbr.rel (0) target = $region13
    $region12: #{tpu_custom_call.1} parent=1 // pred_region
      _
    $region13: #{tpu_custom_call.1} parent=1 // pred_fallthru
      _
    // Predicated region
    $region14: #{tpu_custom_call.1} parent=1 // pred_check
      _
    $region15: #{tpu_custom_call.1} parent=1 // pred_check_branch
      %44 = sbr.rel (0) target = $region17
    $region16: #{tpu_custom_call.1} parent=1 // pred_region
      %s46 = ssub.s32 704, 704
      %47 = vsyncadd [#allocation8], %s46
      %s48 = sshll.u32 [#allocation9], 4
      %s49 = int_to_ptr.vmem [resolvable:$true] %s48
      %54 = dma.hbm_to_vmem [thread:$0]  %s3, 704, %s49, [#allocation8], 64, 64, 4
    $region17: #{tpu_custom_call.1} parent=1 // pred_fallthru
      _
    // Predicated region
    $region18: #{tpu_custom_call.1} parent=1 // pred_check
      _
    $region19: #{tpu_custom_call.1} parent=1 // pred_check_branch
      %56 = sbr.rel (0) target = $region21
    $region20: #{tpu_custom_call.1} parent=1 // pred_region
      _
    $region21: #{tpu_custom_call.1} parent=1 // pred_fallthru
      _
    // Predicated region
    $region22: #{tpu_custom_call.1} parent=1 // pred_check
      _
    $region23: #{tpu_custom_call.1} parent=1 // pred_check_branch
      %58 = sbr.rel (0) target = $region25
    $region24: #{tpu_custom_call.1} parent=1 // pred_region
      _
    $region25: #{tpu_custom_call.1} parent=1 // pred_fallthru
      _
    // Predicated region
    $region26: #{tpu_custom_call.1} parent=1 // pred_check
      _
    $region27: #{tpu_custom_call.1} parent=1 // pred_check_branch
      %60 = sbr.rel (0) target = $region29
    $region28: #{tpu_custom_call.1} parent=1 // pred_region
      _
    $region29: #{tpu_custom_call.1} parent=1 // pred_fallthru
      _
    // Predicated region
    $region30: #{tpu_custom_call.1} parent=1 // pred_check
      _
    $region31: #{tpu_custom_call.1} parent=1 // pred_check_branch
      %62 = sbr.rel (0) target = $region33
    $region32: #{tpu_custom_call.1} parent=1 // pred_region
      %63 = dma.done [#allocation5], 1024
    $region33: #{tpu_custom_call.1} parent=1 // pred_fallthru
      _
    // Predicated region
    $region34: #{tpu_custom_call.1} parent=1 // pred_check
      _
    $region35: #{tpu_custom_call.1} parent=1 // pred_check_branch
      %65 = sbr.rel (0) target = $region37
    $region36: #{tpu_custom_call.1} parent=1 // pred_region
      %66 = dma.done [#allocation8], 512
    $region37: #{tpu_custom_call.1} parent=1 // pred_fallthru
      _
    // Predicated region
    $region38: #{tpu_custom_call.1} parent=1 // pred_check
      _
    $region39: #{tpu_custom_call.1} parent=1 // pred_check_branch
      %68 = sbr.rel (0) target = $region41
    $region40: #{tpu_custom_call.1} parent=1 // pred_region
      %69 = dma.done [#allocation8], 704
    $region41: #{tpu_custom_call.1} parent=1 // pred_fallthru
      _
    %v71 = vld [vmem:[#allocation4] sm:$0xff]
    %v72 = vld [vmem:[#allocation4 + $0x8] sm:$0xff]
    %v73 = vld [vmem:[#allocation4 + $0x10] sm:$0xff]
    %v74 = vld [vmem:[#allocation4 + $0x18] sm:$0xff]
    %v75 = vld [vmem:[#allocation4 + $0x20] sm:$0xff]
    %v76 = vld [vmem:[#allocation4 + $0x28] sm:$0xff]
    %v77 = vld [vmem:[#allocation4 + $0x30] sm:$0xff]
    %v78 = vld [vmem:[#allocation4 + $0x38] sm:$0xff]
    %v79 = vld [vmem:[#allocation7] sm:$0xff]
    %v80 = vld [vmem:[#allocation7 + $0x8] sm:$0xff]
    %v81 = vld [vmem:[#allocation7 + $0x10] sm:$0xff]
    %v82 = vld [vmem:[#allocation7 + $0x18] sm:$0xff]
    %v83 = vmul.f32 %v71, %v79
    %v84 = vmul.f32 %v72, %v80
    %v85 = vmul.f32 %v73, %v81
    %v86 = vmul.f32 %v74, %v82
    %v87 = vmul.f32 %v75, %v79
    %v88 = vmul.f32 %v76, %v80
    %v89 = vmul.f32 %v77, %v81
    %v90 = vmul.f32 %v78, %v82
    %vm91 = vcmask 662528
    %v92 = vsel %vm91, %v83, 0.0
    %v93 = vsel %vm91, %v84, 0.0
    %v94 = vadd.f32 %v92, %v93
    %v95 = vsel %vm91, %v85, 0.0
    %v96 = vadd.f32 %v94, %v95
    %v97 = vsel %vm91, %v86, 0.0
    %v98 = vadd.f32 %v96, %v97
    %v99 = vrot.slane %v98, 4
    %v100 = vadd.f32 %v98, %v99
    %v101 = vrot.slane %v100, 2
    %v102 = vadd.f32 %v100, %v101
    %v103 = vrot.slane %v102, 1
    %v104 = vadd.f32 %v102, %v103
    %v105 = vsel %vm91, %v87, 0.0
    %v106 = vsel %vm91, %v88, 0.0
    %v107 = vadd.f32 %v105, %v106
    %v108 = vsel %vm91, %v89, 0.0
    %v109 = vadd.f32 %v107, %v108
    %v110 = vsel %vm91, %v90, 0.0
    %v111 = vadd.f32 %v109, %v110
    %v112 = vrot.slane %v111, 4
    %v113 = vadd.f32 %v111, %v112
    %v114 = vrot.slane %v113, 2
    %v115 = vadd.f32 %v113, %v114
    %v116 = vrot.slane %v115, 1
    %v117 = vadd.f32 %v115, %v116
    %s118 = sld [smem:[#allocation2]]
    %v119 = vstv %s118
    %v120 = vadd.f32 %v104, %v119
    %v121 = vadd.f32 %v117, %v119
    %v122 = vmax.f32 %v120, 0.0
    %v123 = vmax.f32 %v121, 0.0
    %v124 = vpack.c.bf16 %v122, %v122
    %v125 = vpack.c.bf16 %v123, %v123
    %v126 = vld [vmem:[#allocation9] sm:$0xf]
    %v127 = vld [vmem:[#allocation9 + $0x4] sm:$0xf]
    %v128 = vld [vmem:[#allocation9 + $0x8] sm:$0xf]
    %v129 = vld [vmem:[#allocation9 + $0xc] sm:$0xf]
    %v130 = vld [vmem:[#allocation9 + $0x10] sm:$0xf]
    %v131 = vld [vmem:[#allocation9 + $0x14] sm:$0xf]
    %v132 = vld [vmem:[#allocation9 + $0x18] sm:$0xf]
    %v133 = vld [vmem:[#allocation9 + $0x1c] sm:$0xf]
    %v134 = vld [vmem:[#allocation9 + $0x20] sm:$0xf]
    %v135 = vld [vmem:[#allocation9 + $0x24] sm:$0xf]
    %v136 = vld [vmem:[#allocation9 + $0x28] sm:$0x1]
    %v137 = vld [vmem:[%s4] sm:$0x1]
    %v139 = vlaneseq
    %v140 = vshrl.u32 %v139, 7
    %v141 = vsub.s32 0, %v140
    %v142 = vrot.slane %v137, %v141
    %v146 = vunpack.c.l.b16 %v124
    %v147 = vunpack.c.l.b16 %v125
    %vm148 = vcmask 1041409
    %v149 = vsel %vm148, %v147, %v146
    %v150 = vpack.c.b16 %v149, %v149
    %v162 = vunpack.c.l.b16 %v126
    %v163 = vunpack.c.l.b16 %v127
    %v164 = vunpack.c.l.b16 %v128
    %v165 = vunpack.c.l.b16 %v129
    %v166 = vunpack.c.l.b16 %v130
    %v167 = vunpack.c.l.b16 %v131
    %v168 = vunpack.c.l.b16 %v132
    %v169 = vunpack.c.l.b16 %v133
    %v170 = vunpack.c.l.b16 %v134
    %v171 = vunpack.c.l.b16 %v135
    %v172 = vunpack.c.l.b16 %v136
    %v173 = vpack.c.b16 %v163, %v162
    %v174 = vpack.c.b16 %v165, %v164
    %v175 = vpack.c.b16 %v167, %v166
    %v176 = vpack.c.b16 %v169, %v168
    %v177 = vpack.c.b16 %v171, %v170
    %v178 = vpack.c.b16 %v172, %v172
    %v185 = vsel %vm91, %v150, 0
    %vm187 = vcmask 1040384
    %v188 = vsel 0, 4294967295, 65535
    %v189 = vsel %vm187, %v188, 0
    %v191 = vand.u32 %v178, %v189
    %193 = vmatprep.subr.bf16.mxu0 0
    %194 = vmatpush1.bf16.msra.mxu0 0
    %195 = vmatprep.subr.bf16.mxu0 0
    %196 = vmatpush1.bf16.msra.mxu0 0
    %197 = vmatprep.subr.bf16.mxu0 0
    %198 = vmatpush1.bf16.msra.mxu0 %v191
    %199 = vmatprep.subr.bf16.mxu0 0
    %200 = vmatpush1.bf16.msra.mxu0 %v177
    %201 = vmatprep.subr.bf16.mxu0 0
    %202 = vmatpush1.bf16.msra.mxu0 %v176
    %203 = vmatprep.subr.bf16.mxu0 0
    %204 = vmatpush1.bf16.msra.mxu0 %v175
    %205 = vmatprep.subr.bf16.mxu0 0
    %206 = vmatpush1.bf16.msra.mxu0 %v174
    %207 = vmatprep.subr.bf16.mxu0 0
    %208 = vmatpush1.bf16.msra.mxu0 %v173
    %209 = vmatprep.subr.bf16.mxu0 0
    %210 = vmatpush2.bf16.msra.mxu0 0
    %211 = vmatprep.subr.bf16.mxu0 0
    %212 = vmatpush2.bf16.msra.mxu0 0
    %213 = vmatprep.subr.bf16.mxu0 0
    %214 = vmatpush2.bf16.msra.mxu0 0
    %215 = vmatprep.subr.bf16.mxu0 0
    %216 = vmatpush2.bf16.msra.mxu0 0
    %217 = vmatprep.subr.bf16.mxu0 0
    %218 = vmatpush2.bf16.msra.mxu0 0
    %219 = vmatprep.subr.bf16.mxu0 0
    %220 = vmatpush2.bf16.msra.mxu0 0
    %221 = vmatprep.subr.bf16.mxu0 0
    %222 = vmatpush2.bf16.msra.mxu0 0
    %223 = vmatprep.subr.bf16.mxu0 0
    %224 = vmatpush2.bf16.msra.mxu0 0
    %225 = vmatprep.mubr.bf16.mxu0 0
    %226 = vmatmul.mubr.bf16.gmra.mxu0 %v185
    %v227 = vpop.f32.mrf.mxu0
    %v228 = vadd.f32 %v142, %v227
    %v229 = vpop.f32.mrf.mxu0
    %v230 = vpop.f32.mrf.mxu0
    %v231 = vpop.f32.mrf.mxu0
    %232 = vdwg.mxu0
    %v233 = vmax.f32 %v228, 0.0
    %v234 = vld [vmem:[%s5] sm:$0x1]
    %v235 = vpack.c.bf16 %v233, %v233
    %s236 = sld [smem:[#allocation3]]
    %v237 = vstv %s236
    %238 = vmatprep.subr.bf16.mxu0 0
    %239 = vmatpush1.bf16.xpose.msra.mxu0 0
    %240 = vmatprep.subr.bf16.mxu0 0
    %241 = vmatpush1.bf16.xpose.msra.mxu0 0
    %242 = vmatprep.subr.bf16.mxu0 0
    %243 = vmatpush1.bf16.xpose.msra.mxu0 0
    %244 = vmatprep.subr.bf16.mxu0 0
    %245 = vmatpush1.bf16.xpose.msra.mxu0 0
    %246 = vmatprep.subr.bf16.mxu0 0
    %247 = vmatpush1.bf16.xpose.msra.mxu0 0
    %248 = vmatprep.subr.bf16.mxu0 0
    %249 = vmatpush1.bf16.xpose.msra.mxu0 0
    %250 = vmatprep.subr.bf16.mxu0 0
    %251 = vmatpush1.bf16.xpose.msra.mxu0 0
    %252 = vmatprep.subr.bf16.mxu0 0
    %253 = vmatpush1.bf16.xpose.msra.mxu0 %v235
    %254 = vmatprep.subr.bf16.mxu0 0
    %255 = vmatpush2.bf16.xpose.msra.mxu0 0
    %256 = vmatprep.subr.bf16.mxu0 0
    %257 = vmatpush2.bf16.xpose.msra.mxu0 0
    %258 = vmatprep.subr.bf16.mxu0 0
    %259 = vmatpush2.bf16.xpose.msra.mxu0 0
    %260 = vmatprep.subr.bf16.mxu0 0
    %261 = vmatpush2.bf16.xpose.msra.mxu0 0
    %262 = vmatprep.subr.bf16.mxu0 0
    %263 = vmatpush2.bf16.xpose.msra.mxu0 0
    %264 = vmatprep.subr.bf16.mxu0 0
    %265 = vmatpush2.bf16.xpose.msra.mxu0 0
    %266 = vmatprep.subr.bf16.mxu0 0
    %267 = vmatpush2.bf16.xpose.msra.mxu0 0
    %268 = vmatprep.subr.bf16.mxu0 0
    %269 = vmatpush2.bf16.xpose.msra.mxu0 0
    %270 = vmatprep.mubr.bf16.mxu0 0
    %271 = vmatmul.mubr.bf16.gmra.mxu0 %v234
    %v272 = vpop.f32.mrf.mxu0
    %v273 = vadd.f32 %v237, %v272
    %v274 = vpop.f32.mrf.mxu0
    %v275 = vpop.f32.mrf.mxu0
    %v276 = vpop.f32.mrf.mxu0
    %277 = vdwg.mxu0
    %v278 = vtanh.pop %v273
    %vm279 = vcmask 8192
    %280 = vst.msk [vmem:[#allocation10] sm:$0x1] %vm279, %v278
    // Predicated region
    $region42: #{tpu_custom_call.1} parent=1 // pred_check
      _
    $region43: #{tpu_custom_call.1} parent=1 // pred_check_branch
      %282 = sbr.rel (0) target = $region45
    $region44: #{tpu_custom_call.1} parent=1 // pred_region
      %s284 = ssub.s32 16, 16
      %285 = vsyncadd [#allocation6], %s284
      %s287 = sshll.u32 [#allocation10], 4
      %s288 = int_to_ptr.vmem [resolvable:$true] %s287
      %290 = dma.vmem_to_hbm [thread:$0]  %s288, 16, %s7, [#allocation6]
    $region45: #{tpu_custom_call.1} parent=1 // pred_fallthru
      _
    // Predicated region
    $region46: #{tpu_custom_call.1} parent=1 // pred_check
      _
    $region47: #{tpu_custom_call.1} parent=1 // pred_check_branch
      %292 = sbr.rel (0) target = $region49
    $region48: #{tpu_custom_call.1} parent=1 // pred_region
      %293 = dma.done [#allocation6], 16
    $region49: #{tpu_custom_call.1} parent=1 // pred_fallthru
      _
    %294 = vsyncpa [#allocation5], 1
    %295 = vsyncpa [#allocation8], 1
    %296 = vsyncpa [#allocation6], 1

</llo_original>
